<compile_context>
chip_gen: v6e
topology: v6e:2x2x1
jax: 0.10.0
libtpu: 0.0.40
codegen_flags: <defaults>
</compile_context>

<pallas_src>
import jax
import jax.numpy as jnp
from jax.experimental import pallas as pl
from jax.experimental.pallas import tpu as pltpu


def _ensemble_kernel(x_ref, w_ref, b_ref, o_ref, w_acc_ref):
    m = pl.program_id(2)

    @pl.when(m == 0)
    def _():
        w_acc_ref[...] = jnp.zeros_like(w_acc_ref)

    # Sum member weights for this (H, tn) tile on the VPU (f32 accumulation).
    w_acc_ref[...] += w_ref[...].astype(jnp.float32)

    @pl.when(m == pl.num_programs(2) - 1)
    def _():
        inv_m = 1.0 / pl.num_programs(2)
        w_mean = w_acc_ref[...] * inv_m
        # One MXU matmul per output tile; mean bias added once at finalize.
        logits = jnp.dot(x_ref[...], w_mean, preferred_element_type=jnp.float32)
        o_ref[...] = (logits + b_ref[...]).astype(o_ref.dtype)


def _round_up(v, m):
    return ((v + m - 1) // m) * m


def mutual_ensemble(x, W, b, *, weights_dtype=None):
    """Averaged logits over M linear member models.

    x: [B, H] float32
    W: [M, H, C]
    b: [M, C] or [M, 1, C]
    returns: [B, C] float32  == mean_i (x @ W_i + b_i)
    """
    B, H = x.shape
    M, Hw, C = W.shape
    assert Hw == H
    b2 = jnp.reshape(b, (M, C))

    # TODO(synk): the PyTorch module truncates logits_total if a member returns
    # a smaller batch; with identical kwargs fed to every member this branch is
    # unreachable and is not modeled here.

    # ---- tile sizes (128-aligned lane dim, 8-aligned sublane dim) ----------
    B_pad = _round_up(B, 8)
    if B_pad > 256:
        tm = 256
        B_pad = _round_up(B, tm)
    else:
        tm = B_pad

    C_pad = _round_up(C, 128)
    if C_pad > 512:
        tn = 512
        C_pad = _round_up(C, tn)
    else:
        tn = C_pad
    # TODO(synk): H is kept as a single (full) K block; tile it as an extra
    # "arbitrary" grid axis for very large hidden sizes.

    # ---- wrapper-side prep: padding, bias mean, optional bf16 weights ------
    xp = x if B_pad == B else jnp.pad(x, ((0, B_pad - B), (0, 0)))
    Wp = W if C_pad == C else jnp.pad(W, ((0, 0), (0, 0), (0, C_pad - C)))
    if weights_dtype is not None:
        Wp = Wp.astype(weights_dtype)
    b_mean = jnp.mean(b2.astype(jnp.float32), axis=0, keepdims=True)  # [1, C]
    if C_pad != C:
        b_mean = jnp.pad(b_mean, ((0, 0), (0, C_pad - C)))

    grid = (B_pad // tm, C_pad // tn, M)

    # ---- VMEM budget (double-buffered inputs/outputs + W accumulator) ------
    x_bytes = jnp.dtype(xp.dtype).itemsize
    w_bytes = jnp.dtype(Wp.dtype).itemsize
    est = (2 * tm * H * x_bytes + 2 * H * tn * w_bytes + 2 * tn * 4
           + 2 * tm * tn * 4 + H * tn * 4)
    vmem_limit = min(int(est * 1.5) + (4 << 20), 64 << 20)

    out = pl.pallas_call(
        _ensemble_kernel,
        out_shape=jax.ShapeDtypeStruct((B_pad, C_pad), jnp.float32),
        grid_spec=pltpu.PrefetchScalarGridSpec(
            num_scalar_prefetch=0,
            grid=grid,
            in_specs=[
                # x tile: depends only on the batch-tile index (stays resident
                # across the whole M reduction and the C sweep).
                pl.BlockSpec((tm, H), lambda i, j, m: (i, 0)),
                # per-member weight tile; leading model dim squeezed away.
                pl.BlockSpec((None, H, tn), lambda i, j, m: (m, 0, j)),
                # mean bias tile (already averaged in the wrapper).
                pl.BlockSpec((1, tn), lambda i, j, m: (0, j)),
            ],
            # Output block index is independent of the reduction axis m, so the
            # tile stays resident and is written exactly once at finalize.
            out_specs=pl.BlockSpec((tm, tn), lambda i, j, m: (i, j)),
            scratch_shapes=[pltpu.VMEM((H, tn), jnp.float32)],
        ),
        compiler_params=pltpu.CompilerParams(
            dimension_semantics=("parallel", "parallel", "arbitrary"),
            vmem_limit_bytes=vmem_limit,
        ),
    )(xp, Wp, b_mean)

    return out[:B, :C]


if __name__ == "__main__":
    # Small, deterministic example shapes (batch, hidden, classes, members).
    B, H, C, M = 8, 32, 16, 3

    key = jax.random.PRNGKey(0)
    kx, kw, kb = jax.random.split(key, 3)
    x = jax.random.normal(kx, (B, H), dtype=jnp.float32)
    W = jax.random.normal(kw, (M, H, C), dtype=jnp.float32) * 0.1
    b = jax.random.normal(kb, (M, 1, C), dtype=jnp.float32) * 0.1

    # Stream member weights as bf16 (kernel is HBM-bound on W); accumulation
    # and the final matmul stay f32.
    out = mutual_ensemble(x, W, b, weights_dtype=jnp.bfloat16)
    out = jax.block_until_ready(out)

    # Pure-JAX reference: mean over member-model logits (same bf16 weights).
    W_ref = W.astype(jnp.bfloat16).astype(jnp.float32)
    ref = jnp.mean(jnp.einsum("bh,mhc->mbc", x, W_ref) + b, axis=0)
    assert out.shape == (B, C)
    assert jnp.allclose(out, ref, atol=2e-4, rtol=2e-4), "mismatch vs reference"

    print("KERNEL_OK")
</pallas_src>

<mosaic_0001>
module attributes {stable_mosaic.version = 11 : i64} {
  func.func @_ensemble_kernel(%arg0: i32, %arg1: i32, %arg2: i32, %arg3: memref<8x32xf32, #tpu.memory_space<vmem>>, %arg4: memref<1x32x128xbf16, #tpu.memory_space<vmem>>, %arg5: memref<1x128xf32, #tpu.memory_space<vmem>>, %arg6: memref<8x128xf32, #tpu.memory_space<vmem>>, %arg7: memref<32x128xf32, #tpu.memory_space<vmem>>) attributes {dimension_semantics = [#tpu.dimension_semantics<parallel>, #tpu.dimension_semantics<parallel>, #tpu.dimension_semantics<arbitrary>], iteration_bounds = array<i64: 1, 1, 3>, scalar_prefetch = 0 : i64, scratch_operands = 1 : i64, tpu.core_type = #tpu.core_type<tc>, window_params = [{transform_indices = @transform_0, window_bounds = array<i64: 8, 32>}, {transform_indices = @transform_1, window_bounds = array<i64: 1, 32, 128>}, {transform_indices = @transform_2, window_bounds = array<i64: 1, 128>}, {transform_indices = @transform_3, window_bounds = array<i64: 8, 128>}]} {
    %c0_i32 = arith.constant 0 : i32
    %0 = arith.cmpi eq, %arg2, %c0_i32 : i32
    %1 = arith.extui %0 : i1 to i32
    %c0_i32_0 = arith.constant 0 : i32
    %2 = arith.cmpi ne, %1, %c0_i32_0 : i32
    scf.if %2 {
      %cst = arith.constant 0.000000e+00 : f32
      %12 = vector.broadcast %cst : f32 to vector<32x128xf32>
      %c0_8 = arith.constant 0 : index
      %c0_9 = arith.constant 0 : index
      %13 = vector.load %arg7[%c0_8, %c0_9] : memref<32x128xf32, #tpu.memory_space<vmem>>, vector<32x128xf32>
      tpu.vector_store %arg7[%c0_8, %c0_9], %12 {strides = array<i32>} : memref<32x128xf32, #tpu.memory_space<vmem>>, vector<32x128xf32>,
    } else {
    }
    %c0 = arith.constant 0 : index
    %c0_1 = arith.constant 0 : index
    %3 = vector.load %arg7[%c0, %c0_1] : memref<32x128xf32, #tpu.memory_space<vmem>>, vector<32x128xf32>
    %c0_2 = arith.constant 0 : index
    %c0_3 = arith.constant 0 : index
    %c0_4 = arith.constant 0 : index
    %4 = vector.load %arg4[%c0_2, %c0_3, %c0_4] : memref<1x32x128xbf16, #tpu.memory_space<vmem>>, vector<1x32x128xbf16>
    %5 = vector.shape_cast %4 : vector<1x32x128xbf16> to vector<32x128xbf16>
    %6 = arith.extf %5 : vector<32x128xbf16> to vector<32x128xf32>
    %7 = arith.addf %3, %6 : vector<32x128xf32>
    %c0_5 = arith.constant 0 : index
    %c0_6 = arith.constant 0 : index
    %8 = vector.load %arg7[%c0_5, %c0_6] : memref<32x128xf32, #tpu.memory_space<vmem>>, vector<32x128xf32>
    tpu.vector_store %arg7[%c0_5, %c0_6], %7 {strides = array<i32>} : memref<32x128xf32, #tpu.memory_space<vmem>>, vector<32x128xf32>,
    %c2_i32 = arith.constant 2 : i32
    %9 = arith.cmpi eq, %arg2, %c2_i32 : i32
    %10 = arith.extui %9 : i1 to i32
    %c0_i32_7 = arith.constant 0 : i32
    %11 = arith.cmpi ne, %10, %c0_i32_7 : i32
    scf.if %11 {
      %c0_8 = arith.constant 0 : index
      %c0_9 = arith.constant 0 : index
      %12 = vector.load %arg7[%c0_8, %c0_9] : memref<32x128xf32, #tpu.memory_space<vmem>>, vector<32x128xf32>
      %cst = arith.constant 0.333333343 : f32
      %13 = vector.broadcast %cst : f32 to vector<32x128xf32>
      %14 = arith.mulf %12, %13 : vector<32x128xf32>
      %c0_10 = arith.constant 0 : index
      %c0_11 = arith.constant 0 : index
      %15 = vector.load %arg3[%c0_10, %c0_11] : memref<8x32xf32, #tpu.memory_space<vmem>>, vector<8x32xf32>
      %cst_12 = arith.constant dense<0.000000e+00> : vector<8x128xf32>
      %16 = tpu.matmul %15, %14, %cst_12 {dimension_numbers = #tpu.dot_dimension_numbers<[1], [0], [0], [1], [0, 0, 1, 1], [], []>} : vector<8x32xf32>, vector<32x128xf32>, vector<8x128xf32> -> vector<8x128xf32>
      %c0_13 = arith.constant 0 : index
      %c0_14 = arith.constant 0 : index
      %17 = vector.load %arg5[%c0_13, %c0_14] : memref<1x128xf32, #tpu.memory_space<vmem>>, vector<1x128xf32>
      %18 = vector.broadcast %17 : vector<1x128xf32> to vector<8x128xf32>
      %19 = arith.addf %16, %18 : vector<8x128xf32>
      %c0_15 = arith.constant 0 : index
      %c0_16 = arith.constant 0 : index
      %20 = vector.load %arg6[%c0_15, %c0_16] : memref<8x128xf32, #tpu.memory_space<vmem>>, vector<8x128xf32>
      tpu.vector_store %arg6[%c0_15, %c0_16], %19 {strides = array<i32>} : memref<8x128xf32, #tpu.memory_space<vmem>>, vector<8x128xf32>,
    } else {
    }
    return
  }
  func.func @transform_0(%arg0: i32, %arg1: i32, %arg2: i32) -> (i32, i32) {
    %c0_i32 = arith.constant 0 : i32
    %c0_i32_0 = arith.constant 0 : i32
    return %arg0, %c0_i32 : i32, i32
  }
  func.func @transform_1(%arg0: i32, %arg1: i32, %arg2: i32) -> (i32, i32, i32) {
    %c0_i32 = arith.constant 0 : i32
    %c0_i32_0 = arith.constant 0 : i32
    return %arg2, %c0_i32, %arg1 : i32, i32, i32
  }
  func.func @transform_2(%arg0: i32, %arg1: i32, %arg2: i32) -> (i32, i32) {
    %c0_i32 = arith.constant 0 : i32
    %c0_i32_0 = arith.constant 0 : i32
    return %c0_i32, %arg1 : i32, i32
  }
  func.func @transform_3(%arg0: i32, %arg1: i32, %arg2: i32) -> (i32, i32) {
    %c0_i32 = arith.constant 0 : i32
    return %arg0, %arg1 : i32, i32
  }
}

</mosaic_0001>

<llo_original>
// kernel: tpu_custom_call.1
$region0: #{tpu_custom_call.1}
  #allocation0 [shape = 'u32[]', space=smem, size = 0x4, offset = 0x4, fixed_abs, tag = 'smem constant byte address 0x4 - core index']
  #allocation1 [shape = 'u32[144,128]{1,0:T(1,128)}', space=vmem, size = 0x12000, scoped, tag = 'internal scratch']
  #allocation2 [shape = 'f32[32,128]{1,0:T(8,128)}', space=vmem, size = 0x4000, scoped, tag = 'scratch operand']
  %s0 = inlined_call_operand.hbm [shape: f32[8,32], index: 0, kind: input, shape index: {}]
  %s1 = inlined_call_operand.hbm [shape: bf16[3,32,128], index: 1, kind: input, shape index: {}]
  %s2 = inlined_call_operand.vmem [shape: f32[1,128], index: 2, kind: input, shape index: {}]
  %s3 = inlined_call_operand.hbm [shape: f32[8,128], index: 3, kind: output, shape index: {}]
  %s4 = sld [smem:[#allocation0]]
  $region61: #{tpu_custom_call.1} parent=0
    _
  %s6 = ssub.s32 1, %s4
  %s7 = scalar_select 0, %s6, %s4
  $region1: #{tpu_custom_call.1} parent=0
    #allocation3 [shape = 'u8[4096]{0}', space=vmem, size = 0x1000, scoped, tag = 'input window, operand 0, single buffered']
    #allocation4 [shape = 's32[2]{0}', space=sflag, size = 0x8, scoped, tag = 'scoped memory for tpu_custom_call.1']
    #allocation5 [shape = 's32[2]{0}', space=sflag, size = 0x8, scoped, tag = 'scoped memory for tpu_custom_call.1']
    #allocation6 [shape = 'u8[16384]{0}', space=vmem, size = 0x4000, scoped, tag = 'input window, operand 1']
    #allocation7 [shape = 's32[2]{0}', space=sflag, size = 0x8, scoped, tag = 'scoped memory for tpu_custom_call.1']
    #allocation8 [shape = 'u8[4096]{0}', space=vmem, size = 0x1000, scoped, tag = 'output window, operand 0, single buffered']
    %8 = vsyncpa [#allocation4], 0
    %9 = vsyncpa [#allocation7], 0
    %s10 = scalar_lea.sflag [#allocation7], 1
    %11 = vsyncpa %s10, 0
    %12 = vsyncpa [#allocation5], 0
    loop: start=0, step=1, limit=5
    $region2: #{tpu_custom_call.1} parent=1 // loop_pre_header
      _
    $region3: #{tpu_custom_call.1} parent=1 // loop_header
      %s14 = sphi 0, %s18
      %p15 = scmp.ge.s32.totalorder %s14, 5
      %s21 = sphi 0, %s40
      %s22 = sphi 0, %s36
      %s23 = sphi 0, %s32
      %s24 = sphi 0, %s21
      %s25 = sphi 0, %s22
      %s26 = sphi 0, %s23
      %s27 = sphi 0, %s24
      %s28 = sphi 0, %s25
      %s29 = sphi 0, %s26
      %s43 = sphi 0, %s45
      %s46 = sphi 0, %s43
      %s47 = sphi 0, %s46
      %s63 = sphi 0, %s47
      %s71 = sphi 0, %s73
      %s74 = sphi 0, %s71
      %s75 = sphi 0, %s74
      %s91 = sphi 0, %s75
      %s97 = sphi 0, %s99
      %s100 = sphi 0, %s97
      %s101 = sphi 0, %s100
      %s117 = sphi 0, %s101
      %s125 = sphi 0, %s127
      %s128 = sphi 0, %s125
      %s129 = sphi 0, %s128
      %s145 = sphi 0, %s129
    $region4: #{tpu_custom_call.1} parent=1 // loop_header_branch
      %17 = sbr.rel (%p15) target = $region8
    $region5: #{tpu_custom_call.1} parent=1 // loop_body
      %s19 = ssub.s32 %s14, 1
      %s20 = ssub.s32 %s14, 2
      %s30 = sadd.s32 1, %s23
      %p31 = scmp.ge.s32.totalorder %s30, 3
      %s32 = scalar_select %p31, 0, %s30
      %s33 = sadd.s32 1, %s22
      %s34 = scalar_select %p31, %s33, %s22
      %p35 = scmp.ge.s32.totalorder %s34, 1
      %s36 = scalar_select %p35, 0, %s34
      %s37 = sadd.s32 1, %s21
      %s38 = scalar_select %p35, %s37, %s21
      %p39 = scmp.ge.s32.totalorder %s38, 1
      %s40 = scalar_select %p39, 0, %s38
      %s41 = ssub.s32 %s21, %s40
      %p42 = scmp.eq.s32.totalorder %s41, 0
      %s44 = sadd.s32 %s43, 1
      %s45 = scalar_select %p42, %s43, %s44
      %p48 = pneg %p42
      %p49 = scmp.eq.s32.totalorder %s14, 2
      %p50 = por %p48, %p49
      %p51 = scmp.ne.s32.totalorder %s43, %s46
      %p52 = scmp.eq.s32.totalorder %s14, 0
      %p53 = por %p51, %p52
      %p54 = scmp.ne.s32.totalorder %s43, %s46
      %p55 = scmp.eq.s32.totalorder %s19, 2
      %p56 = por %p54, %p55
      %p57 = scmp.ne.s32.totalorder %s46, %s47
      %p58 = scmp.eq.s32.totalorder %s19, 0
      %p59 = por %p57, %p58
      %p60 = scmp.ne.s32.totalorder %s46, %s47
      %p61 = scmp.eq.s32.totalorder %s20, 2
      %p62 = por %p60, %p61
      %p64 = scmp.ne.s32.totalorder %s47, %s63
      %p65 = scmp.eq.s32.totalorder %s20, 0
      %p66 = por %p64, %p65
      %s67 = ssub.s32 %s23, %s32
      %s68 = ssub.s32 %s22, %s36
      %s69 = sor.u32 %s67, %s68
      %p70 = scmp.eq.s32.totalorder %s69, 0
      %s72 = sadd.s32 %s71, 1
      %s73 = scalar_select %p70, %s71, %s72
      %p76 = pneg %p70
      %p77 = scmp.eq.s32.totalorder %s14, 2
      %p78 = por %p76, %p77
      %p79 = scmp.ne.s32.totalorder %s71, %s74
      %p80 = scmp.eq.s32.totalorder %s14, 0
      %p81 = por %p79, %p80
      %p82 = scmp.ne.s32.totalorder %s71, %s74
      %p83 = scmp.eq.s32.totalorder %s19, 2
      %p84 = por %p82, %p83
      %p85 = scmp.ne.s32.totalorder %s74, %s75
      %p86 = scmp.eq.s32.totalorder %s19, 0
      %p87 = por %p85, %p86
      %p88 = scmp.ne.s32.totalorder %s74, %s75
      %p89 = scmp.eq.s32.totalorder %s20, 2
      %p90 = por %p88, %p89
      %p92 = scmp.ne.s32.totalorder %s75, %s91
      %p93 = scmp.eq.s32.totalorder %s20, 0
      %p94 = por %p92, %p93
      %s95 = ssub.s32 %s22, %s36
      %p96 = scmp.eq.s32.totalorder %s95, 0
      %s98 = sadd.s32 %s97, 1
      %s99 = scalar_select %p96, %s97, %s98
      %p102 = pneg %p96
      %p103 = scmp.eq.s32.totalorder %s14, 2
      %p104 = por %p102, %p103
      %p105 = scmp.ne.s32.totalorder %s97, %s100
      %p106 = scmp.eq.s32.totalorder %s14, 0
      %p107 = por %p105, %p106
      %p108 = scmp.ne.s32.totalorder %s97, %s100
      %p109 = scmp.eq.s32.totalorder %s19, 2
      %p110 = por %p108, %p109
      %p111 = scmp.ne.s32.totalorder %s100, %s101
      %p112 = scmp.eq.s32.totalorder %s19, 0
      %p113 = por %p111, %p112
      %p114 = scmp.ne.s32.totalorder %s100, %s101
      %p115 = scmp.eq.s32.totalorder %s20, 2
      %p116 = por %p114, %p115
      %p118 = scmp.ne.s32.totalorder %s101, %s117
      %p119 = scmp.eq.s32.totalorder %s20, 0
      %p120 = por %p118, %p119
      %s121 = ssub.s32 %s21, %s40
      %s122 = ssub.s32 %s22, %s36
      %s123 = sor.u32 %s121, %s122
      %p124 = scmp.eq.s32.totalorder %s123, 0
      %s126 = sadd.s32 %s125, 1
      %s127 = scalar_select %p124, %s125, %s126
      %p130 = pneg %p124
      %p131 = scmp.eq.s32.totalorder %s14, 2
      %p132 = por %p130, %p131
      %p133 = scmp.ne.s32.totalorder %s125, %s128
      %p134 = scmp.eq.s32.totalorder %s14, 0
      %p135 = por %p133, %p134
      %p136 = scmp.ne.s32.totalorder %s125, %s128
      %p137 = scmp.eq.s32.totalorder %s19, 2
      %p138 = por %p136, %p137
      %p139 = scmp.ne.s32.totalorder %s128, %s129
      %p140 = scmp.eq.s32.totalorder %s19, 0
      %p141 = por %p139, %p140
      %p142 = scmp.ne.s32.totalorder %s128, %s129
      %p143 = scmp.eq.s32.totalorder %s20, 2
      %p144 = por %p142, %p143
      %p146 = scmp.ne.s32.totalorder %s129, %s145
      %p147 = scmp.eq.s32.totalorder %s20, 0
      %p148 = por %p146, %p147
      %p149 = scmp.le.s32.totalorder 1, %s14
      %p150 = scmp.lt.s32.totalorder %s14, 4
      %p151 = pnand %p149, %p150
      %p152 = pneg %p151
      // Predicated region
      $region9: #{tpu_custom_call.1} parent=5 // pred_check
        _
      $region10: #{tpu_custom_call.1} parent=5 // pred_check_branch
        %154 = sbr.rel (%p151) target = $region12
      $region11: #{tpu_custom_call.1} parent=5 // pred_region
        %s155 = ssub.s32 %s14, 1
        // Predicated region
        $region13: #{tpu_custom_call.1} parent=11 // pred_check
          %p156 = pneg %p59
        $region14: #{tpu_custom_call.1} parent=11 // pred_check_branch
          %158 = sbr.rel (%p156) target = $region16
        $region15: #{tpu_custom_call.1} parent=11 // pred_region
          %s160 = ssub.s32 128, 128
          %161 = vsyncadd [#allocation4], %s160
          %s162 = smul.addr %s24, 128
          %s163 = scalar_lea.hbm %s0, %s162
          %s165 = sshll.u32 [#allocation3], 4
          %s166 = int_to_ptr.vmem [resolvable:$true] %s165
          %168 = dma.hbm_to_vmem [thread:$0]  %s163, 128, %s166, [#allocation4]
        $region16: #{tpu_custom_call.1} parent=11 // pred_fallthru
          _
        // Predicated region
        $region17: #{tpu_custom_call.1} parent=11 // pred_check
          %p169 = pneg %p113
        $region18: #{tpu_custom_call.1} parent=11 // pred_check_branch
          %171 = sbr.rel (%p169) target = $region20
        $region19: #{tpu_custom_call.1} parent=11 // pred_region
          %p172 = scmp.lt.s32.totalorder %s25, 0
          %s173 = scalar_select %p172, %s25, 0
          %s174 = scalar_lea.vmem %s2, %s173
        $region20: #{tpu_custom_call.1} parent=11 // pred_fallthru
          _
      $region12: #{tpu_custom_call.1} parent=5 // pred_fallthru
        _
      %p175 = scmp.lt.s32.totalorder %s14, 3
      // Predicated region
      $region21: #{tpu_custom_call.1} parent=5 // pred_check
        %p176 = pneg %p175
      $region22: #{tpu_custom_call.1} parent=5 // pred_check_branch
        %178 = sbr.rel (%p176) target = $region24
      $region23: #{tpu_custom_call.1} parent=5 // pred_region
        // Predicated region
        $region25: #{tpu_custom_call.1} parent=23 // pred_check
          %p179 = pneg %p81
        $region26: #{tpu_custom_call.1} parent=23 // pred_check_branch
          %181 = sbr.rel (%p179) target = $region28
        $region27: #{tpu_custom_call.1} parent=23 // pred_region
          %s182 = sand.u32 %s71, 1
          %s183 = scalar_lea.sflag [#allocation7], %s182
          %s184 = sand.u32 %s71, 1
          %s185 = smul.addr %s184, 16
          %s186 = scalar_lea.vmem [#allocation6], %s185
          %s188 = ssub.s32 256, 256
          %189 = vsyncadd %s183, %s188
          %s190 = smul.addr %s23, 4
          %s191 = sadd.s32 %s22, %s190
          %s192 = smul.addr %s191, 64
          %s193 = scalar_lea.hbm %s1, %s192
          %s194 = sshll.u32 %s186, 4
          %s195 = int_to_ptr.vmem [resolvable:$true] %s194
          %200 = dma.hbm_to_vmem [thread:$0]  %s193, 256, %s195, %s183, 64, 64, 4
        $region28: #{tpu_custom_call.1} parent=23 // pred_fallthru
          _
      $region24: #{tpu_custom_call.1} parent=5 // pred_fallthru
        _
      %p201 = scmp.le.s32.totalorder 1, %s14
      %p202 = scmp.lt.s32.totalorder %s14, 4
      %p203 = pnand %p201, %p202
      %p204 = pneg %p203
      // Predicated region
      $region29: #{tpu_custom_call.1} parent=5 // pred_check
        _
      $region30: #{tpu_custom_call.1} parent=5 // pred_check_branch
        %206 = sbr.rel (%p203) target = $region32
      $region31: #{tpu_custom_call.1} parent=5 // pred_region
        %s207 = ssub.s32 %s14, 1
        // Predicated region
        $region33: #{tpu_custom_call.1} parent=31 // pred_check
          %p208 = pneg %p59
        $region34: #{tpu_custom_call.1} parent=31 // pred_check_branch
          %210 = sbr.rel (%p208) target = $region36
        $region35: #{tpu_custom_call.1} parent=31 // pred_region
          %211 = dma.done [#allocation4], 128
        $region36: #{tpu_custom_call.1} parent=31 // pred_fallthru
          _
        %s212 = sand.u32 %s74, 1
        %s213 = scalar_lea.sflag [#allocation7], %s212
        %s214 = sand.u32 %s74, 1
        %s215 = smul.addr %s214, 16
        %s216 = scalar_lea.vmem [#allocation6], %s215
        // Predicated region
        $region37: #{tpu_custom_call.1} parent=31 // pred_check
          %p217 = pneg %p87
        $region38: #{tpu_custom_call.1} parent=31 // pred_check_branch
          %219 = sbr.rel (%p217) target = $region40
        $region39: #{tpu_custom_call.1} parent=31 // pred_region
          %220 = dma.done %s213, 256
        $region40: #{tpu_custom_call.1} parent=31 // pred_fallthru
          _
        %p221 = pneg %p59
        %p222 = pneg %p56
        %s223 = sand.u32 %s74, 1
        %s224 = scalar_lea.sflag [#allocation7], %s223
        %s225 = sand.u32 %s74, 1
        %s226 = smul.addr %s225, 16
        %s227 = scalar_lea.vmem [#allocation6], %s226
        %p228 = pneg %p87
        %p229 = pneg %p84
        %p230 = scmp.lt.s32.totalorder %s25, 0
        %s231 = scalar_select %p230, %s25, 0
        %s232 = scalar_lea.vmem %s2, %s231
        %p233 = pneg %p113
        %p234 = pneg %p110
        %p235 = pneg %p141
        %p236 = pneg %p138
        %p237 = scmp.lt.s32.totalorder %s25, 0
        %s238 = scalar_select %p237, %s25, 0
        %s239 = scalar_lea.vmem %s2, %s238
        %p240 = scmp.eq.s32.totalorder %s26, 0
        // Predicated region
        $region41: #{tpu_custom_call.1} parent=31 // pred_check
          %p241 = pneg %p240
        $region42: #{tpu_custom_call.1} parent=31 // pred_check_branch
          %243 = sbr.rel (%p241) target = $region44
        $region43: #{tpu_custom_call.1} parent=31 // pred_region
          %244 = vst [vmem:[#allocation2] sm:$0xff] 0.0
          %245 = vst [vmem:[#allocation2 + $0x8] sm:$0xff] 0.0
          %246 = vst [vmem:[#allocation2 + $0x10] sm:$0xff] 0.0
          %247 = vst [vmem:[#allocation2 + $0x18] sm:$0xff] 0.0
        $region44: #{tpu_custom_call.1} parent=31 // pred_fallthru
          _
        %v248 = vld [vmem:[#allocation2] sm:$0xff]
        %v249 = vld [vmem:[#allocation2 + $0x8] sm:$0xff]
        %v250 = vld [vmem:[#allocation2 + $0x10] sm:$0xff]
        %v251 = vld [vmem:[#allocation2 + $0x18] sm:$0xff]
        %v252 = vld [vmem:[%s216] sm:$0xf]
        %v253 = vld [vmem:[%s216 + $0x4] sm:$0xf]
        %v254 = vld [vmem:[%s216 + $0x8] sm:$0xf]
        %v255 = vld [vmem:[%s216 + $0xc] sm:$0xf]
        %v256 = vunpack.c.l.bf16 %v252
        %v257 = vunpack.c.l.bf16 %v253
        %v258 = vunpack.c.l.bf16 %v254
        %v259 = vunpack.c.l.bf16 %v255
        %v260 = vadd.f32 %v248, %v256
        %v261 = vadd.f32 %v249, %v257
        %v262 = vadd.f32 %v250, %v258
        %v263 = vadd.f32 %v251, %v259
        %264 = vst [vmem:[#allocation2] sm:$0xff] %v260
        %265 = vst [vmem:[#allocation2 + $0x8] sm:$0xff] %v261
        %266 = vst [vmem:[#allocation2 + $0x10] sm:$0xff] %v262
        %267 = vst [vmem:[#allocation2 + $0x18] sm:$0xff] %v263
        %p268 = scmp.eq.s32.totalorder %s26, 2
        // Predicated region
        $region45: #{tpu_custom_call.1} parent=31 // pred_check
          %p269 = pneg %p268
        $region46: #{tpu_custom_call.1} parent=31 // pred_check_branch
          %271 = sbr.rel (%p269) target = $region48
        $region47: #{tpu_custom_call.1} parent=31 // pred_region
          %v272 = vld [vmem:[#allocation2] sm:$0xff]
          %v273 = vld [vmem:[#allocation2 + $0x8] sm:$0xff]
          %v274 = vld [vmem:[#allocation2 + $0x10] sm:$0xff]
          %v275 = vld [vmem:[#allocation2 + $0x18] sm:$0xff]
          %v276 = vmul.f32 %v272, 0.33333334
          %v277 = vmul.f32 %v273, 0.33333334
          %v278 = vmul.f32 %v274, 0.33333334
          %v279 = vmul.f32 %v275, 0.33333334
          %v280 = vld [vmem:[#allocation3] sm:$0xff]
          %v281 = vld [vmem:[%s239] sm:$0x1]
          %v283 = vlaneseq
          %v284 = vshrl.u32 %v283, 7
          %v285 = vsub.s32 0, %v284
          %v286 = vrot.slane %v281, %v285
          %vm288 = vcmask 261120
          %v290 = vsel %vm288, %v280, 0
          %292 = vmatprep.subr.mxu0 0.0
          %293 = vmatpush1.msra.mxu0 0.0
          %294 = vmatprep.subr.mxu0 0.0
          %295 = vmatpush1.msra.mxu0 0.0
          %296 = vmatprep.subr.mxu0 0.0
          %297 = vmatpush1.msra.mxu0 0.0
          %298 = vmatprep.subr.mxu0 0.0
          %299 = vmatpush1.msra.mxu0 0.0
          %300 = vmatprep.subr.mxu0 0.0
          %301 = vmatpush1.msra.mxu0 0.0
          %302 = vmatprep.subr.mxu0 0.0
          %303 = vmatpush1.msra.mxu0 0.0
          %304 = vmatprep.subr.mxu0 0.0
          %305 = vmatpush1.msra.mxu0 0.0
          %306 = vmatprep.subr.mxu0 0.0
          %307 = vmatpush1.msra.mxu0 0.0
          %308 = vmatprep.subr.mxu0 0.0
          %309 = vmatpush1.msra.mxu0 0.0
          %310 = vmatprep.subr.mxu0 0.0
          %311 = vmatpush1.msra.mxu0 0.0
          %312 = vmatprep.subr.mxu0 0.0
          %313 = vmatpush1.msra.mxu0 0.0
          %314 = vmatprep.subr.mxu0 0.0
          %315 = vmatpush1.msra.mxu0 0.0
          %316 = vmatprep.subr.mxu0 0.0
          %317 = vmatpush1.msra.mxu0 %v279
          %318 = vmatprep.subr.mxu0 0.0
          %319 = vmatpush1.msra.mxu0 %v278
          %320 = vmatprep.subr.mxu0 0.0
          %321 = vmatpush1.msra.mxu0 %v277
          %322 = vmatprep.subr.mxu0 0.0
          %323 = vmatpush1.msra.mxu0 %v276
          %324 = vmatprep.subr.mxu0 0.0
          %325 = vmatpush2.msra.mxu0 0.0
          %326 = vmatprep.subr.mxu0 0.0
          %327 = vmatpush2.msra.mxu0 0.0
          %328 = vmatprep.subr.mxu0 0.0
          %329 = vmatpush2.msra.mxu0 0.0
          %330 = vmatprep.subr.mxu0 0.0
          %331 = vmatpush2.msra.mxu0 0.0
          %332 = vmatprep.subr.mxu0 0.0
          %333 = vmatpush2.msra.mxu0 0.0
          %334 = vmatprep.subr.mxu0 0.0
          %335 = vmatpush2.msra.mxu0 0.0
          %336 = vmatprep.subr.mxu0 0.0
          %337 = vmatpush2.msra.mxu0 0.0
          %338 = vmatprep.subr.mxu0 0.0
          %339 = vmatpush2.msra.mxu0 0.0
          %340 = vmatprep.subr.mxu0 0.0
          %341 = vmatpush2.msra.mxu0 0.0
          %342 = vmatprep.subr.mxu0 0.0
          %343 = vmatpush2.msra.mxu0 0.0
          %344 = vmatprep.subr.mxu0 0.0
          %345 = vmatpush2.msra.mxu0 0.0
          %346 = vmatprep.subr.mxu0 0.0
          %347 = vmatpush2.msra.mxu0 0.0
          %348 = vmatprep.subr.mxu0 0.0
          %349 = vmatpush2.msra.mxu0 0.0
          %350 = vmatprep.subr.mxu0 0.0
          %351 = vmatpush2.msra.mxu0 0.0
          %352 = vmatprep.subr.mxu0 0.0
          %353 = vmatpush2.msra.mxu0 0.0
          %354 = vmatprep.subr.mxu0 0.0
          %355 = vmatpush2.msra.mxu0 0.0
          %356 = vmatprep.mubr.f32.mxu0 0.0
          %357 = vmatmul.mubr.f32.gmra.mxu0 %v290
          %v358 = vpop.f32.mrf.mxu0
          %v359 = vadd.f32 %v286, %v358
          %v360 = vpop.f32.mrf.mxu0
          %361 = vdwg.mxu0
          %362 = vst [vmem:[#allocation8] sm:$0xff] %v359
        $region48: #{tpu_custom_call.1} parent=31 // pred_fallthru
          _
        // Predicated region
        $region49: #{tpu_custom_call.1} parent=31 // pred_check
          %p363 = pneg %p138
        $region50: #{tpu_custom_call.1} parent=31 // pred_check_branch
          %365 = sbr.rel (%p363) target = $region52
        $region51: #{tpu_custom_call.1} parent=31 // pred_region
          %s367 = ssub.s32 128, 128
          %368 = vsyncadd [#allocation5], %s367
          %s369 = sadd.s32 %s25, %s24
          %s370 = smul.addr %s369, 128
          %s371 = scalar_lea.hbm %s3, %s370
          %s373 = sshll.u32 [#allocation8], 4
          %s374 = int_to_ptr.vmem [resolvable:$true] %s373
          %376 = dma.vmem_to_hbm [thread:$0]  %s374, 128, %s371, [#allocation5]
        $region52: #{tpu_custom_call.1} parent=31 // pred_fallthru
          _
        // Predicated region
        $region53: #{tpu_custom_call.1} parent=31 // pred_check
          %p377 = pneg %p138
        $region54: #{tpu_custom_call.1} parent=31 // pred_check_branch
          %379 = sbr.rel (%p377) target = $region56
        $region55: #{tpu_custom_call.1} parent=31 // pred_region
          %380 = dma.done [#allocation5], 128
        $region56: #{tpu_custom_call.1} parent=31 // pred_fallthru
          _
      $region32: #{tpu_custom_call.1} parent=5 // pred_fallthru
        _
      %p381 = scmp.le.s32.totalorder 2, %s14
      // Predicated region
      $region57: #{tpu_custom_call.1} parent=5 // pred_check
        %p382 = pneg %p381
      $region58: #{tpu_custom_call.1} parent=5 // pred_check_branch
        %384 = sbr.rel (%p382) target = $region60
      $region59: #{tpu_custom_call.1} parent=5 // pred_region
        %s385 = ssub.s32 %s14, 2
      $region60: #{tpu_custom_call.1} parent=5 // pred_fallthru
        _
    $region6: #{tpu_custom_call.1} parent=1 // loop_footer
      %s18 = sadd.s32 1, %s14
    $region7: #{tpu_custom_call.1} parent=1 // loop_footer_branch
      %13 = sbr.rel target = $region3
    $region8: #{tpu_custom_call.1} parent=1 // loop_exit
      _
    %386 = vsyncpa [#allocation4], 1
    %s387 = scalar_lea.sflag [#allocation4], 1
    %388 = vsyncpa %s387, 1
    %389 = vsyncpa [#allocation7], 1
    %s390 = scalar_lea.sflag [#allocation7], 1
    %391 = vsyncpa %s390, 1
    %392 = vsyncpa [#allocation5], 1
    %s393 = scalar_lea.sflag [#allocation5], 1
    %394 = vsyncpa %s393, 1

</llo_original>
